<compile_context>
chip_gen: v7x
topology: tpu7x:2x2x1
jax: 0.10.0
libtpu: 0.0.40
codegen_flags: <defaults>
</compile_context>

<pallas_src>
import functools

import jax
import jax.numpy as jnp
import numpy as np
from jax.experimental import pallas as pl
from jax.experimental.pallas import tpu as pltpu


def _round_up(x, m):
    return (x + m - 1) // m * m


def _convt_where_kernel(w_ref, bias_ref, x_ref, out_ref, pad_ref,
                        *, cout, kh, kw, h, w, oh, ow):
    """w_ref   : SMEM f32[1, cout, kh, kw]  native PyTorch IOHW weights (unflipped)
       bias_ref: SMEM f32[cout]
       x_ref   : VMEM f32[1, 1, h, w]       native NCHW input
       out_ref : VMEM f32[1, cout, oh, ow]  exact output (no post-call slice)
       pad_ref : VMEM f32[PR, PL]           scratch: zero-extended input plane
    """
    pr, pl_ = pad_ref.shape

    # Zero-extend the input plane inside the kernel (no wrapper-side pad, no
    # extra HBM round trip).
    pad_ref[...] = jnp.zeros_like(pad_ref)
    pad_ref[0:h, 0:w] = x_ref[0, 0]
    z = pad_ref[...]                                      # (PR, PL)

    # conv_transpose identity:
    #   y[co, a, b] = bias[co] + sum_{u,v} x_ext[a - u, b - v] * w[co, u, v]
    # and x_ext[a - u, b - v] == roll(roll(z, u, axis=0), v, axis=1)[a, b]
    # because every wrapped-around row/lane of z is zero (PR >= oh, PL >= ow,
    # pad region is zero).  Taps outer / channels inner: each rolled plane is
    # computed once (XLU slot) and reused for all `cout` accumulators.
    accs = [jnp.full((pr, pl_), bias_ref[co], dtype=jnp.float32)
            for co in range(cout)]
    for u in range(kh):
        zu = z if u == 0 else pltpu.roll(z, shift=u, axis=0)
        for v in range(kw):
            plane = zu if v == 0 else pltpu.roll(zu, shift=v, axis=1)
            for co in range(cout):
                accs[co] = accs[co] + plane * w_ref[0, co, u, v]

    # t2 = y > 1 ; t3 = y * 6.732 ; t4 = where(t2, y, t3); store exact (oh, ow).
    for co in range(cout):
        y = accs[co]
        y = jnp.where(y > 1.0, y, y * 6.732)
        out_ref[0, co] = y[:oh, :ow]


@jax.jit
def conv_transpose_where(x, weight, bias):
    """x: (1, 1, H, W) f32; weight: (1, Cout, KH, KW) f32 (PyTorch IOHW layout);
       bias: (Cout,) f32.  Returns (1, Cout, H+KH-1, W+KW-1) f32."""
    n, cin, h, w = x.shape
    assert n == 1 and cin == 1, "synthetic module uses N=1, Cin=1"
    wcin, cout, kh, kw = weight.shape
    assert wcin == cin
    oh, ow = h + kh - 1, w + kw - 1

    pr = _round_up(oh, 8)          # sublane-aligned scratch rows
    pl_lanes = _round_up(ow, 128)  # lane-dense scratch columns
    # Roll-with-wraparound is only valid if wrapped rows/lanes land on zeros.
    assert pr >= oh and pl_lanes >= ow

    kernel = functools.partial(_convt_where_kernel,
                               cout=cout, kh=kh, kw=kw, h=h, w=w, oh=oh, ow=ow)

    flops = 2 * cout * kh * kw * oh * ow
    bytes_accessed = 4 * (h * w + cout * kh * kw + cout + cout * oh * ow)

    # No grid: the problem is launch-overhead bound at these shapes.
    # TODO(synk): if this op ever runs over a real batch / inside a larger
    # model, add a leading grid axis over N with
    # dimension_semantics=("parallel",) so v7x's two TensorCores split the
    # work; for N=1, Cout=3 a grid only adds per-step loop overhead.
    out = pl.pallas_call(
        kernel,
        out_shape=jax.ShapeDtypeStruct((1, cout, oh, ow), jnp.float32),
        in_specs=[
            pl.BlockSpec(memory_space=pltpu.SMEM),   # weights, native IOHW shape
            pl.BlockSpec(memory_space=pltpu.SMEM),   # bias
            pl.BlockSpec(memory_space=pltpu.VMEM),   # input, native NCHW shape
        ],
        out_specs=pl.BlockSpec(memory_space=pltpu.VMEM),
        scratch_shapes=[pltpu.VMEM((pr, pl_lanes), jnp.float32)],
        cost_estimate=pl.CostEstimate(flops=flops, transcendentals=0,
                                      bytes_accessed=bytes_accessed),
    )(weight, bias, x)
    return out


def _reference(x, weight, bias):
    """Direct numpy implementation of PyTorch ConvTranspose2d + where."""
    x = np.asarray(x, np.float32)
    w = np.asarray(weight, np.float32)
    b = np.asarray(bias, np.float32)
    n, cin, h, wd = x.shape
    _, cout, kh, kw = w.shape
    out = np.zeros((n, cout, h + kh - 1, wd + kw - 1), np.float32)
    out += b[None, :, None, None]
    for co in range(cout):
        for ci in range(cin):
            for i in range(h):
                for j in range(wd):
                    out[:, co, i:i + kh, j:j + kw] += x[:, ci, i, j, None, None] * w[ci, co]
    return np.where(out > 1.0, out, out * 6.732)


if __name__ == "__main__":
    key = jax.random.PRNGKey(0)
    kx, kw_, kb = jax.random.split(key, 3)

    H, W = 16, 25
    KH, KW = 2, 4
    CIN, COUT = 1, 3

    x = jax.random.normal(kx, (1, CIN, H, W), dtype=jnp.float32)
    # Deterministic parameter init (PyTorch-style uniform bound k = 1/(cin*kh*kw))
    bound = 1.0 / np.sqrt(CIN * KH * KW)
    weight = jax.random.uniform(kw_, (CIN, COUT, KH, KW),
                                minval=-bound, maxval=bound, dtype=jnp.float32)
    bias = jax.random.uniform(kb, (COUT,), minval=-bound, maxval=bound,
                              dtype=jnp.float32)

    out = conv_transpose_where(x, weight, bias)
    out = jax.block_until_ready(out)

    ref = _reference(np.asarray(x), np.asarray(weight), np.asarray(bias))
    np.testing.assert_allclose(np.asarray(out), ref, rtol=1e-5, atol=1e-5)

    print("KERNEL_OK")
</pallas_src>

<mosaic_0001>
module attributes {stable_mosaic.version = 11 : i64} {
  func.func @_convt_where_kernel(%arg0: memref<1x3x2x4xf32, #tpu.memory_space<smem>>, %arg1: memref<3xf32, #tpu.memory_space<smem>>, %arg2: memref<1x1x16x25xf32, #tpu.memory_space<vmem>>, %arg3: memref<1x3x17x28xf32, #tpu.memory_space<vmem>>, %arg4: memref<24x128xf32, #tpu.memory_space<vmem>>) attributes {dimension_semantics = [], scalar_prefetch = 0 : i64, scratch_operands = 1 : i64, tpu.core_type = #tpu.core_type<tc>} {
    %cst = arith.constant 0.000000e+00 : f32
    %0 = vector.broadcast %cst : f32 to vector<24x128xf32>
    %c0 = arith.constant 0 : index
    %c0_0 = arith.constant 0 : index
    %1 = vector.load %arg4[%c0, %c0_0] : memref<24x128xf32, #tpu.memory_space<vmem>>, vector<24x128xf32>
    tpu.vector_store %arg4[%c0, %c0_0], %0 {strides = array<i32>} : memref<24x128xf32, #tpu.memory_space<vmem>>, vector<24x128xf32>,
    %c0_1 = arith.constant 0 : index
    %c0_2 = arith.constant 0 : index
    %c0_3 = arith.constant 0 : index
    %c0_4 = arith.constant 0 : index
    %2 = vector.load %arg2[%c0_1, %c0_2, %c0_3, %c0_4] : memref<1x1x16x25xf32, #tpu.memory_space<vmem>>, vector<1x1x16x25xf32>
    %3 = vector.shape_cast %2 : vector<1x1x16x25xf32> to vector<16x25xf32>
    %c0_5 = arith.constant 0 : index
    %c0_6 = arith.constant 0 : index
    %4 = vector.load %arg4[%c0_5, %c0_6] : memref<24x128xf32, #tpu.memory_space<vmem>>, vector<16x25xf32>
    tpu.vector_store %arg4[%c0_5, %c0_6], %3 {strides = array<i32>} : memref<24x128xf32, #tpu.memory_space<vmem>>, vector<16x25xf32>,
    %c0_7 = arith.constant 0 : index
    %c0_8 = arith.constant 0 : index
    %5 = vector.load %arg4[%c0_7, %c0_8] : memref<24x128xf32, #tpu.memory_space<vmem>>, vector<24x128xf32>
    %c0_9 = arith.constant 0 : index
    %6 = memref.load %arg1[%c0_9] : memref<3xf32, #tpu.memory_space<smem>>
    %7 = vector.broadcast %6 : f32 to vector<24x128xf32>
    %c1 = arith.constant 1 : index
    %8 = memref.load %arg1[%c1] : memref<3xf32, #tpu.memory_space<smem>>
    %9 = vector.broadcast %8 : f32 to vector<24x128xf32>
    %c2 = arith.constant 2 : index
    %10 = memref.load %arg1[%c2] : memref<3xf32, #tpu.memory_space<smem>>
    %11 = vector.broadcast %10 : f32 to vector<24x128xf32>
    %c0_10 = arith.constant 0 : index
    %c0_11 = arith.constant 0 : index
    %c0_12 = arith.constant 0 : index
    %c0_13 = arith.constant 0 : index
    %12 = memref.load %arg0[%c0_10, %c0_11, %c0_12, %c0_13] : memref<1x3x2x4xf32, #tpu.memory_space<smem>>
    %13 = vector.broadcast %12 : f32 to vector<24x128xf32>
    %14 = arith.mulf %5, %13 : vector<24x128xf32>
    %15 = arith.addf %7, %14 : vector<24x128xf32>
    %c0_14 = arith.constant 0 : index
    %c1_15 = arith.constant 1 : index
    %c0_16 = arith.constant 0 : index
    %c0_17 = arith.constant 0 : index
    %16 = memref.load %arg0[%c0_14, %c1_15, %c0_16, %c0_17] : memref<1x3x2x4xf32, #tpu.memory_space<smem>>
    %17 = vector.broadcast %16 : f32 to vector<24x128xf32>
    %18 = arith.mulf %5, %17 : vector<24x128xf32>
    %19 = arith.addf %9, %18 : vector<24x128xf32>
    %c0_18 = arith.constant 0 : index
    %c2_19 = arith.constant 2 : index
    %c0_20 = arith.constant 0 : index
    %c0_21 = arith.constant 0 : index
    %20 = memref.load %arg0[%c0_18, %c2_19, %c0_20, %c0_21] : memref<1x3x2x4xf32, #tpu.memory_space<smem>>
    %21 = vector.broadcast %20 : f32 to vector<24x128xf32>
    %22 = arith.mulf %5, %21 : vector<24x128xf32>
    %23 = arith.addf %11, %22 : vector<24x128xf32>
    %c1_i32 = arith.constant 1 : i32
    %24 = tpu.dynamic_rotate %5 by %c1_i32 dim 1 : vector<24x128xf32>, i32 -> vector<24x128xf32>
    %c0_22 = arith.constant 0 : index
    %c0_23 = arith.constant 0 : index
    %c0_24 = arith.constant 0 : index
    %c1_25 = arith.constant 1 : index
    %25 = memref.load %arg0[%c0_22, %c0_23, %c0_24, %c1_25] : memref<1x3x2x4xf32, #tpu.memory_space<smem>>
    %26 = vector.broadcast %25 : f32 to vector<24x128xf32>
    %27 = arith.mulf %24, %26 : vector<24x128xf32>
    %28 = arith.addf %15, %27 : vector<24x128xf32>
    %c0_26 = arith.constant 0 : index
    %c1_27 = arith.constant 1 : index
    %c0_28 = arith.constant 0 : index
    %c1_29 = arith.constant 1 : index
    %29 = memref.load %arg0[%c0_26, %c1_27, %c0_28, %c1_29] : memref<1x3x2x4xf32, #tpu.memory_space<smem>>
    %30 = vector.broadcast %29 : f32 to vector<24x128xf32>
    %31 = arith.mulf %24, %30 : vector<24x128xf32>
    %32 = arith.addf %19, %31 : vector<24x128xf32>
    %c0_30 = arith.constant 0 : index
    %c2_31 = arith.constant 2 : index
    %c0_32 = arith.constant 0 : index
    %c1_33 = arith.constant 1 : index
    %33 = memref.load %arg0[%c0_30, %c2_31, %c0_32, %c1_33] : memref<1x3x2x4xf32, #tpu.memory_space<smem>>
    %34 = vector.broadcast %33 : f32 to vector<24x128xf32>
    %35 = arith.mulf %24, %34 : vector<24x128xf32>
    %36 = arith.addf %23, %35 : vector<24x128xf32>
    %c2_i32 = arith.constant 2 : i32
    %37 = tpu.dynamic_rotate %5 by %c2_i32 dim 1 : vector<24x128xf32>, i32 -> vector<24x128xf32>
    %c0_34 = arith.constant 0 : index
    %c0_35 = arith.constant 0 : index
    %c0_36 = arith.constant 0 : index
    %c2_37 = arith.constant 2 : index
    %38 = memref.load %arg0[%c0_34, %c0_35, %c0_36, %c2_37] : memref<1x3x2x4xf32, #tpu.memory_space<smem>>
    %39 = vector.broadcast %38 : f32 to vector<24x128xf32>
    %40 = arith.mulf %37, %39 : vector<24x128xf32>
    %41 = arith.addf %28, %40 : vector<24x128xf32>
    %c0_38 = arith.constant 0 : index
    %c1_39 = arith.constant 1 : index
    %c0_40 = arith.constant 0 : index
    %c2_41 = arith.constant 2 : index
    %42 = memref.load %arg0[%c0_38, %c1_39, %c0_40, %c2_41] : memref<1x3x2x4xf32, #tpu.memory_space<smem>>
    %43 = vector.broadcast %42 : f32 to vector<24x128xf32>
    %44 = arith.mulf %37, %43 : vector<24x128xf32>
    %45 = arith.addf %32, %44 : vector<24x128xf32>
    %c0_42 = arith.constant 0 : index
    %c2_43 = arith.constant 2 : index
    %c0_44 = arith.constant 0 : index
    %c2_45 = arith.constant 2 : index
    %46 = memref.load %arg0[%c0_42, %c2_43, %c0_44, %c2_45] : memref<1x3x2x4xf32, #tpu.memory_space<smem>>
    %47 = vector.broadcast %46 : f32 to vector<24x128xf32>
    %48 = arith.mulf %37, %47 : vector<24x128xf32>
    %49 = arith.addf %36, %48 : vector<24x128xf32>
    %c3_i32 = arith.constant 3 : i32
    %50 = tpu.dynamic_rotate %5 by %c3_i32 dim 1 : vector<24x128xf32>, i32 -> vector<24x128xf32>
    %c0_46 = arith.constant 0 : index
    %c0_47 = arith.constant 0 : index
    %c0_48 = arith.constant 0 : index
    %c3 = arith.constant 3 : index
    %51 = memref.load %arg0[%c0_46, %c0_47, %c0_48, %c3] : memref<1x3x2x4xf32, #tpu.memory_space<smem>>
    %52 = vector.broadcast %51 : f32 to vector<24x128xf32>
    %53 = arith.mulf %50, %52 : vector<24x128xf32>
    %54 = arith.addf %41, %53 : vector<24x128xf32>
    %c0_49 = arith.constant 0 : index
    %c1_50 = arith.constant 1 : index
    %c0_51 = arith.constant 0 : index
    %c3_52 = arith.constant 3 : index
    %55 = memref.load %arg0[%c0_49, %c1_50, %c0_51, %c3_52] : memref<1x3x2x4xf32, #tpu.memory_space<smem>>
    %56 = vector.broadcast %55 : f32 to vector<24x128xf32>
    %57 = arith.mulf %50, %56 : vector<24x128xf32>
    %58 = arith.addf %45, %57 : vector<24x128xf32>
    %c0_53 = arith.constant 0 : index
    %c2_54 = arith.constant 2 : index
    %c0_55 = arith.constant 0 : index
    %c3_56 = arith.constant 3 : index
    %59 = memref.load %arg0[%c0_53, %c2_54, %c0_55, %c3_56] : memref<1x3x2x4xf32, #tpu.memory_space<smem>>
    %60 = vector.broadcast %59 : f32 to vector<24x128xf32>
    %61 = arith.mulf %50, %60 : vector<24x128xf32>
    %62 = arith.addf %49, %61 : vector<24x128xf32>
    %c1_i32_57 = arith.constant 1 : i32
    %63 = tpu.dynamic_rotate %5 by %c1_i32_57 dim 0 : vector<24x128xf32>, i32 -> vector<24x128xf32>
    %c0_58 = arith.constant 0 : index
    %c0_59 = arith.constant 0 : index
    %c1_60 = arith.constant 1 : index
    %c0_61 = arith.constant 0 : index
    %64 = memref.load %arg0[%c0_58, %c0_59, %c1_60, %c0_61] : memref<1x3x2x4xf32, #tpu.memory_space<smem>>
    %65 = vector.broadcast %64 : f32 to vector<24x128xf32>
    %66 = arith.mulf %63, %65 : vector<24x128xf32>
    %67 = arith.addf %54, %66 : vector<24x128xf32>
    %c0_62 = arith.constant 0 : index
    %c1_63 = arith.constant 1 : index
    %c1_64 = arith.constant 1 : index
    %c0_65 = arith.constant 0 : index
    %68 = memref.load %arg0[%c0_62, %c1_63, %c1_64, %c0_65] : memref<1x3x2x4xf32, #tpu.memory_space<smem>>
    %69 = vector.broadcast %68 : f32 to vector<24x128xf32>
    %70 = arith.mulf %63, %69 : vector<24x128xf32>
    %71 = arith.addf %58, %70 : vector<24x128xf32>
    %c0_66 = arith.constant 0 : index
    %c2_67 = arith.constant 2 : index
    %c1_68 = arith.constant 1 : index
    %c0_69 = arith.constant 0 : index
    %72 = memref.load %arg0[%c0_66, %c2_67, %c1_68, %c0_69] : memref<1x3x2x4xf32, #tpu.memory_space<smem>>
    %73 = vector.broadcast %72 : f32 to vector<24x128xf32>
    %74 = arith.mulf %63, %73 : vector<24x128xf32>
    %75 = arith.addf %62, %74 : vector<24x128xf32>
    %c1_i32_70 = arith.constant 1 : i32
    %76 = tpu.dynamic_rotate %63 by %c1_i32_70 dim 1 : vector<24x128xf32>, i32 -> vector<24x128xf32>
    %c0_71 = arith.constant 0 : index
    %c0_72 = arith.constant 0 : index
    %c1_73 = arith.constant 1 : index
    %c1_74 = arith.constant 1 : index
    %77 = memref.load %arg0[%c0_71, %c0_72, %c1_73, %c1_74] : memref<1x3x2x4xf32, #tpu.memory_space<smem>>
    %78 = vector.broadcast %77 : f32 to vector<24x128xf32>
    %79 = arith.mulf %76, %78 : vector<24x128xf32>
    %80 = arith.addf %67, %79 : vector<24x128xf32>
    %c0_75 = arith.constant 0 : index
    %c1_76 = arith.constant 1 : index
    %c1_77 = arith.constant 1 : index
    %c1_78 = arith.constant 1 : index
    %81 = memref.load %arg0[%c0_75, %c1_76, %c1_77, %c1_78] : memref<1x3x2x4xf32, #tpu.memory_space<smem>>
    %82 = vector.broadcast %81 : f32 to vector<24x128xf32>
    %83 = arith.mulf %76, %82 : vector<24x128xf32>
    %84 = arith.addf %71, %83 : vector<24x128xf32>
    %c0_79 = arith.constant 0 : index
    %c2_80 = arith.constant 2 : index
    %c1_81 = arith.constant 1 : index
    %c1_82 = arith.constant 1 : index
    %85 = memref.load %arg0[%c0_79, %c2_80, %c1_81, %c1_82] : memref<1x3x2x4xf32, #tpu.memory_space<smem>>
    %86 = vector.broadcast %85 : f32 to vector<24x128xf32>
    %87 = arith.mulf %76, %86 : vector<24x128xf32>
    %88 = arith.addf %75, %87 : vector<24x128xf32>
    %c2_i32_83 = arith.constant 2 : i32
    %89 = tpu.dynamic_rotate %63 by %c2_i32_83 dim 1 : vector<24x128xf32>, i32 -> vector<24x128xf32>
    %c0_84 = arith.constant 0 : index
    %c0_85 = arith.constant 0 : index
    %c1_86 = arith.constant 1 : index
    %c2_87 = arith.constant 2 : index
    %90 = memref.load %arg0[%c0_84, %c0_85, %c1_86, %c2_87] : memref<1x3x2x4xf32, #tpu.memory_space<smem>>
    %91 = vector.broadcast %90 : f32 to vector<24x128xf32>
    %92 = arith.mulf %89, %91 : vector<24x128xf32>
    %93 = arith.addf %80, %92 : vector<24x128xf32>
    %c0_88 = arith.constant 0 : index
    %c1_89 = arith.constant 1 : index
    %c1_90 = arith.constant 1 : index
    %c2_91 = arith.constant 2 : index
    %94 = memref.load %arg0[%c0_88, %c1_89, %c1_90, %c2_91] : memref<1x3x2x4xf32, #tpu.memory_space<smem>>
    %95 = vector.broadcast %94 : f32 to vector<24x128xf32>
    %96 = arith.mulf %89, %95 : vector<24x128xf32>
    %97 = arith.addf %84, %96 : vector<24x128xf32>
    %c0_92 = arith.constant 0 : index
    %c2_93 = arith.constant 2 : index
    %c1_94 = arith.constant 1 : index
    %c2_95 = arith.constant 2 : index
    %98 = memref.load %arg0[%c0_92, %c2_93, %c1_94, %c2_95] : memref<1x3x2x4xf32, #tpu.memory_space<smem>>
    %99 = vector.broadcast %98 : f32 to vector<24x128xf32>
    %100 = arith.mulf %89, %99 : vector<24x128xf32>
    %101 = arith.addf %88, %100 : vector<24x128xf32>
    %c3_i32_96 = arith.constant 3 : i32
    %102 = tpu.dynamic_rotate %63 by %c3_i32_96 dim 1 : vector<24x128xf32>, i32 -> vector<24x128xf32>
    %c0_97 = arith.constant 0 : index
    %c0_98 = arith.constant 0 : index
    %c1_99 = arith.constant 1 : index
    %c3_100 = arith.constant 3 : index
    %103 = memref.load %arg0[%c0_97, %c0_98, %c1_99, %c3_100] : memref<1x3x2x4xf32, #tpu.memory_space<smem>>
    %104 = vector.broadcast %103 : f32 to vector<24x128xf32>
    %105 = arith.mulf %102, %104 : vector<24x128xf32>
    %106 = arith.addf %93, %105 : vector<24x128xf32>
    %c0_101 = arith.constant 0 : index
    %c1_102 = arith.constant 1 : index
    %c1_103 = arith.constant 1 : index
    %c3_104 = arith.constant 3 : index
    %107 = memref.load %arg0[%c0_101, %c1_102, %c1_103, %c3_104] : memref<1x3x2x4xf32, #tpu.memory_space<smem>>
    %108 = vector.broadcast %107 : f32 to vector<24x128xf32>
    %109 = arith.mulf %102, %108 : vector<24x128xf32>
    %110 = arith.addf %97, %109 : vector<24x128xf32>
    %c0_105 = arith.constant 0 : index
    %c2_106 = arith.constant 2 : index
    %c1_107 = arith.constant 1 : index
    %c3_108 = arith.constant 3 : index
    %111 = memref.load %arg0[%c0_105, %c2_106, %c1_107, %c3_108] : memref<1x3x2x4xf32, #tpu.memory_space<smem>>
    %112 = vector.broadcast %111 : f32 to vector<24x128xf32>
    %113 = arith.mulf %102, %112 : vector<24x128xf32>
    %114 = arith.addf %101, %113 : vector<24x128xf32>
    %cst_109 = arith.constant 1.000000e+00 : f32
    %115 = vector.broadcast %cst_109 : f32 to vector<24x128xf32>
    %116 = arith.cmpf ogt, %106, %115 : vector<24x128xf32>
    %cst_110 = arith.constant 6.732000e+00 : f32
    %117 = vector.broadcast %cst_110 : f32 to vector<24x128xf32>
    %118 = arith.mulf %106, %117 : vector<24x128xf32>
    %119 = arith.select %116, %106, %118 : vector<24x128xi1>, vector<24x128xf32>
    %120 = vector.extract_strided_slice %119 {offsets = [0, 0], sizes = [17, 28], strides = [1, 1]} : vector<24x128xf32> to vector<17x28xf32>
    %c0_111 = arith.constant 0 : index
    %c0_112 = arith.constant 0 : index
    %c0_113 = arith.constant 0 : index
    %c0_114 = arith.constant 0 : index
    %121 = vector.load %arg3[%c0_111, %c0_112, %c0_113, %c0_114] : memref<1x3x17x28xf32, #tpu.memory_space<vmem>>, vector<1x1x17x28xf32>
    %122 = vector.shape_cast %121 : vector<1x1x17x28xf32> to vector<17x28xf32>
    %123 = vector.shape_cast %120 : vector<17x28xf32> to vector<1x1x17x28xf32>
    tpu.vector_store %arg3[%c0_111, %c0_112, %c0_113, %c0_114], %123 {strides = array<i32>} : memref<1x3x17x28xf32, #tpu.memory_space<vmem>>, vector<1x1x17x28xf32>,
    %cst_115 = arith.constant 1.000000e+00 : f32
    %124 = vector.broadcast %cst_115 : f32 to vector<24x128xf32>
    %125 = arith.cmpf ogt, %110, %124 : vector<24x128xf32>
    %cst_116 = arith.constant 6.732000e+00 : f32
    %126 = vector.broadcast %cst_116 : f32 to vector<24x128xf32>
    %127 = arith.mulf %110, %126 : vector<24x128xf32>
    %128 = arith.select %125, %110, %127 : vector<24x128xi1>, vector<24x128xf32>
    %129 = vector.extract_strided_slice %128 {offsets = [0, 0], sizes = [17, 28], strides = [1, 1]} : vector<24x128xf32> to vector<17x28xf32>
    %c0_117 = arith.constant 0 : index
    %c1_118 = arith.constant 1 : index
    %c0_119 = arith.constant 0 : index
    %c0_120 = arith.constant 0 : index
    %130 = vector.load %arg3[%c0_117, %c1_118, %c0_119, %c0_120] : memref<1x3x17x28xf32, #tpu.memory_space<vmem>>, vector<1x1x17x28xf32>
    %131 = vector.shape_cast %130 : vector<1x1x17x28xf32> to vector<17x28xf32>
    %132 = vector.shape_cast %129 : vector<17x28xf32> to vector<1x1x17x28xf32>
    tpu.vector_store %arg3[%c0_117, %c1_118, %c0_119, %c0_120], %132 {strides = array<i32>} : memref<1x3x17x28xf32, #tpu.memory_space<vmem>>, vector<1x1x17x28xf32>,
    %cst_121 = arith.constant 1.000000e+00 : f32
    %133 = vector.broadcast %cst_121 : f32 to vector<24x128xf32>
    %134 = arith.cmpf ogt, %114, %133 : vector<24x128xf32>
    %cst_122 = arith.constant 6.732000e+00 : f32
    %135 = vector.broadcast %cst_122 : f32 to vector<24x128xf32>
    %136 = arith.mulf %114, %135 : vector<24x128xf32>
    %137 = arith.select %134, %114, %136 : vector<24x128xi1>, vector<24x128xf32>
    %138 = vector.extract_strided_slice %137 {offsets = [0, 0], sizes = [17, 28], strides = [1, 1]} : vector<24x128xf32> to vector<17x28xf32>
    %c0_123 = arith.constant 0 : index
    %c2_124 = arith.constant 2 : index
    %c0_125 = arith.constant 0 : index
    %c0_126 = arith.constant 0 : index
    %139 = vector.load %arg3[%c0_123, %c2_124, %c0_125, %c0_126] : memref<1x3x17x28xf32, #tpu.memory_space<vmem>>, vector<1x1x17x28xf32>
    %140 = vector.shape_cast %139 : vector<1x1x17x28xf32> to vector<17x28xf32>
    %141 = vector.shape_cast %138 : vector<17x28xf32> to vector<1x1x17x28xf32>
    tpu.vector_store %arg3[%c0_123, %c2_124, %c0_125, %c0_126], %141 {strides = array<i32>} : memref<1x3x17x28xf32, #tpu.memory_space<vmem>>, vector<1x1x17x28xf32>,
    return
  }
}

</mosaic_0001>

<llo_original>
// kernel: conv_transpose_where.1
$region0: #{conv_transpose_where.1}
  #allocation0 [shape = 'u32[]', space=smem, size = 0x4, offset = 0x4, fixed_abs, tag = 'smem constant byte address 0x4 - core index']
  #allocation1 [shape = 'u32[144,128]{1,0:T(1,128)}', space=vmem, size = 0x12000, scoped, tag = 'internal scratch']
  #allocation2 [shape = 'f32[24,128]{1,0:T(8,128)}', space=vmem, size = 0x3000, scoped, tag = 'scratch operand']
  %s0 = inlined_call_operand.hbm [shape: f32[1,3,2,4], index: 0, kind: input, shape index: {}]
  %s1 = inlined_call_operand.vmem [shape: f32[3], index: 1, kind: input, shape index: {}]
  %s2 = inlined_call_operand.hbm [shape: f32[1,1,16,25], index: 2, kind: input, shape index: {}]
  %s3 = inlined_call_operand.vmem [shape: f32[1,3,17,28], index: 3, kind: output, shape index: {}]
  %s4 = sld [smem:[#allocation0]]
  $region34: #{conv_transpose_where.1} parent=0
    _
  %s6 = ssub.s32 1, %s4
  %s7 = scalar_select 0, %s6, %s4
  $region1: #{conv_transpose_where.1} parent=0
    #allocation3 [shape = 'u8[3072]{0}', space=smem, size = 0xc00, scoped, tag = 'input window, operand 0, single buffered']
    #allocation4 [shape = 's32[1]{0}', space=sflag, size = 0x4, scoped, tag = 'scoped memory for conv_transpose_where.1']
    #allocation5 [shape = 's32[1]{0}', space=sflag, size = 0x4, scoped, tag = 'scoped memory for conv_transpose_where.1']
    #allocation6 [shape = 's32[1]{0}', space=sflag, size = 0x4, scoped, tag = 'scoped memory for conv_transpose_where.1']
    #allocation7 [shape = 'u8[512]{0}', space=smem, size = 0x200, scoped, tag = 'input window, operand 1, single buffered']
    #allocation8 [shape = 'u8[8192]{0}', space=vmem, size = 0x2000, scoped, tag = 'input window, operand 2, single buffered']
    %8 = vsyncpa [#allocation5], 0
    %9 = vsyncpa [#allocation6], 0
    %10 = vsyncpa [#allocation4], 0
    // Predicated region
    $region2: #{conv_transpose_where.1} parent=1 // pred_check
      _
    $region3: #{conv_transpose_where.1} parent=1 // pred_check_branch
      %12 = sbr.rel (0) target = $region5
    $region4: #{conv_transpose_where.1} parent=1 // pred_region
      %s14 = ssub.s32 96, 96
      %15 = vsyncadd [#allocation5], %s14
      %20 = dma.hbm_to_smem %s0, 96, [#allocation3], [#allocation5], 32, 32, 2
    $region5: #{conv_transpose_where.1} parent=1 // pred_fallthru
      _
    // Predicated region
    $region6: #{conv_transpose_where.1} parent=1 // pred_check
      _
    $region7: #{conv_transpose_where.1} parent=1 // pred_check_branch
      %22 = sbr.rel (0) target = $region9
    $region8: #{conv_transpose_where.1} parent=1 // pred_region
      %s24 = ssub.s32 16, 16
      %25 = vsyncadd [#allocation6], %s24
      %s27 = sshll.u32 %s1, 4
      %s28 = int_to_ptr.vmem [resolvable:$true] %s27
      %30 = dma.vmem_to_smem %s28, 16, [#allocation7], [#allocation6]
    $region9: #{conv_transpose_where.1} parent=1 // pred_fallthru
      _
    // Predicated region
    $region10: #{conv_transpose_where.1} parent=1 // pred_check
      _
    $region11: #{conv_transpose_where.1} parent=1 // pred_check_branch
      %32 = sbr.rel (0) target = $region13
    $region12: #{conv_transpose_where.1} parent=1 // pred_region
      %s34 = ssub.s32 256, 256
      %35 = vsyncadd [#allocation4], %s34
      %s36 = sshll.u32 [#allocation8], 4
      %s37 = int_to_ptr.vmem [resolvable:$true] %s36
      %42 = dma.hbm_to_vmem [thread:$0]  %s2, 256, %s37, [#allocation4], 128, 128, 8
    $region13: #{conv_transpose_where.1} parent=1 // pred_fallthru
      _
    // Predicated region
    $region14: #{conv_transpose_where.1} parent=1 // pred_check
      _
    $region15: #{conv_transpose_where.1} parent=1 // pred_check_branch
      %44 = sbr.rel (0) target = $region17
    $region16: #{conv_transpose_where.1} parent=1 // pred_region
      %45 = dma.done [#allocation5], 96
    $region17: #{conv_transpose_where.1} parent=1 // pred_fallthru
      _
    // Predicated region
    $region18: #{conv_transpose_where.1} parent=1 // pred_check
      _
    $region19: #{conv_transpose_where.1} parent=1 // pred_check_branch
      %47 = sbr.rel (0) target = $region21
    $region20: #{conv_transpose_where.1} parent=1 // pred_region
      %48 = dma.done [#allocation6], 16
    $region21: #{conv_transpose_where.1} parent=1 // pred_fallthru
      _
    // Predicated region
    $region22: #{conv_transpose_where.1} parent=1 // pred_check
      _
    $region23: #{conv_transpose_where.1} parent=1 // pred_check_branch
      %50 = sbr.rel (0) target = $region25
    $region24: #{conv_transpose_where.1} parent=1 // pred_region
      %51 = dma.done [#allocation4], 256
    $region25: #{conv_transpose_where.1} parent=1 // pred_fallthru
      _
    %52 = sfence
    %53 = vst [vmem:[#allocation2] sm:$0xff] 0.0
    %54 = vst [vmem:[#allocation2 + $0x8] sm:$0xff] 0.0
    %55 = vst [vmem:[#allocation2 + $0x10] sm:$0xff] 0.0
    %v56 = vld [vmem:[#allocation8] sm:$0xff]
    %v57 = vld [vmem:[#allocation8 + $0x8] sm:$0xff]
    %vm58 = vcmask 203776
    %59 = vst.msk [vmem:[#allocation2] sm:$0xff] %vm58, %v56
    %60 = vst.msk [vmem:[#allocation2 + $0x8] sm:$0xff] %vm58, %v57
    %v61 = vld [vmem:[#allocation2] sm:$0xff]
    %v62 = vld [vmem:[#allocation2 + $0x8] sm:$0xff]
    %v63 = vld [vmem:[#allocation2 + $0x10] sm:$0xff]
    %s64 = sld [smem:[#allocation7]]
    %v65 = vstv %s64
    %s66 = sld [smem:[#allocation7 + $0x1]]
    %v67 = vstv %s66
    %s68 = sld [smem:[#allocation7 + $0x2]]
    %v69 = vstv %s68
    %s70 = sld [smem:[#allocation3]]
    %v71 = vstv %s70
    %v72 = vmul.f32 %v61, %v71
    %v73 = vmul.f32 %v62, %v71
    %v74 = vmul.f32 %v63, %v71
    %v75 = vadd.f32 %v65, %v72
    %v76 = vadd.f32 %v65, %v73
    %v77 = vadd.f32 %v65, %v74
    %s78 = sld [smem:[#allocation3 + $0x100]]
    %v79 = vstv %s78
    %v80 = vmul.f32 %v61, %v79
    %v81 = vmul.f32 %v62, %v79
    %v82 = vmul.f32 %v63, %v79
    %v83 = vadd.f32 %v67, %v80
    %v84 = vadd.f32 %v67, %v81
    %v85 = vadd.f32 %v67, %v82
    %s86 = sld [smem:[#allocation3 + $0x200]]
    %v87 = vstv %s86
    %v88 = vmul.f32 %v61, %v87
    %v89 = vmul.f32 %v62, %v87
    %v90 = vmul.f32 %v63, %v87
    %v91 = vadd.f32 %v69, %v88
    %v92 = vadd.f32 %v69, %v89
    %v93 = vadd.f32 %v69, %v90
    %94 = vrot.lane.b32.xlu0 %v61, 1
    %v95 = vpop.permute.xlu0 %94
    %96 = vrot.lane.b32.xlu0 %v62, 1
    %v97 = vpop.permute.xlu0 %96
    %98 = vrot.lane.b32.xlu0 %v63, 1
    %v99 = vpop.permute.xlu0 %98
    %s100 = sld [smem:[#allocation3 + $0x1]]
    %v101 = vstv %s100
    %v102 = vmul.f32 %v95, %v101
    %v103 = vmul.f32 %v97, %v101
    %v104 = vmul.f32 %v99, %v101
    %v105 = vadd.f32 %v75, %v102
    %v106 = vadd.f32 %v76, %v103
    %v107 = vadd.f32 %v77, %v104
    %s108 = sld [smem:[#allocation3 + $0x101]]
    %v109 = vstv %s108
    %v110 = vmul.f32 %v95, %v109
    %v111 = vmul.f32 %v97, %v109
    %v112 = vmul.f32 %v99, %v109
    %v113 = vadd.f32 %v83, %v110
    %v114 = vadd.f32 %v84, %v111
    %v115 = vadd.f32 %v85, %v112
    %s116 = sld [smem:[#allocation3 + $0x201]]
    %v117 = vstv %s116
    %v118 = vmul.f32 %v95, %v117
    %v119 = vmul.f32 %v97, %v117
    %v120 = vmul.f32 %v99, %v117
    %v121 = vadd.f32 %v91, %v118
    %v122 = vadd.f32 %v92, %v119
    %v123 = vadd.f32 %v93, %v120
    %124 = vrot.lane.b32.xlu0 %v61, 2
    %v125 = vpop.permute.xlu0 %124
    %126 = vrot.lane.b32.xlu0 %v62, 2
    %v127 = vpop.permute.xlu0 %126
    %128 = vrot.lane.b32.xlu0 %v63, 2
    %v129 = vpop.permute.xlu0 %128
    %s130 = sld [smem:[#allocation3 + $0x2]]
    %v131 = vstv %s130
    %v132 = vmul.f32 %v125, %v131
    %v133 = vmul.f32 %v127, %v131
    %v134 = vmul.f32 %v129, %v131
    %v135 = vadd.f32 %v105, %v132
    %v136 = vadd.f32 %v106, %v133
    %v137 = vadd.f32 %v107, %v134
    %s138 = sld [smem:[#allocation3 + $0x102]]
    %v139 = vstv %s138
    %v140 = vmul.f32 %v125, %v139
    %v141 = vmul.f32 %v127, %v139
    %v142 = vmul.f32 %v129, %v139
    %v143 = vadd.f32 %v113, %v140
    %v144 = vadd.f32 %v114, %v141
    %v145 = vadd.f32 %v115, %v142
    %s146 = sld [smem:[#allocation3 + $0x202]]
    %v147 = vstv %s146
    %v148 = vmul.f32 %v125, %v147
    %v149 = vmul.f32 %v127, %v147
    %v150 = vmul.f32 %v129, %v147
    %v151 = vadd.f32 %v121, %v148
    %v152 = vadd.f32 %v122, %v149
    %v153 = vadd.f32 %v123, %v150
    %154 = vrot.lane.b32.xlu0 %v61, 3
    %v155 = vpop.permute.xlu0 %154
    %156 = vrot.lane.b32.xlu0 %v62, 3
    %v157 = vpop.permute.xlu0 %156
    %158 = vrot.lane.b32.xlu0 %v63, 3
    %v159 = vpop.permute.xlu0 %158
    %s160 = sld [smem:[#allocation3 + $0x3]]
    %v161 = vstv %s160
    %v162 = vmul.f32 %v155, %v161
    %v163 = vmul.f32 %v157, %v161
    %v164 = vmul.f32 %v159, %v161
    %v165 = vadd.f32 %v135, %v162
    %v166 = vadd.f32 %v136, %v163
    %v167 = vadd.f32 %v137, %v164
    %s168 = sld [smem:[#allocation3 + $0x103]]
    %v169 = vstv %s168
    %v170 = vmul.f32 %v155, %v169
    %v171 = vmul.f32 %v157, %v169
    %v172 = vmul.f32 %v159, %v169
    %v173 = vadd.f32 %v143, %v170
    %v174 = vadd.f32 %v144, %v171
    %v175 = vadd.f32 %v145, %v172
    %s176 = sld [smem:[#allocation3 + $0x203]]
    %v177 = vstv %s176
    %v178 = vmul.f32 %v155, %v177
    %v179 = vmul.f32 %v157, %v177
    %v180 = vmul.f32 %v159, %v177
    %v181 = vadd.f32 %v151, %v178
    %v182 = vadd.f32 %v152, %v179
    %v183 = vadd.f32 %v153, %v180
    %v184 = vrot.slane %v61, 7
    %v185 = vrot.slane %v62, 7
    %v186 = vrot.slane %v63, 7
    %v187 = vlaneseq
    %v188 = vshrl.u32 %v187, 7
    %vm189 = vcmp.lt.s32.totalorder %v188, 1
    %v190 = vsel %vm189, %v185, %v186
    %v191 = vsel %vm189, %v184, %v185
    %v192 = vsel %vm189, %v186, %v184
    %s193 = sld [smem:[#allocation3 + $0x80]]
    %v194 = vstv %s193
    %v195 = vmul.f32 %v192, %v194
    %v196 = vmul.f32 %v191, %v194
    %v197 = vmul.f32 %v190, %v194
    %v198 = vadd.f32 %v165, %v195
    %v199 = vadd.f32 %v166, %v196
    %v200 = vadd.f32 %v167, %v197
    %s201 = sld [smem:[#allocation3 + $0x180]]
    %v202 = vstv %s201
    %v203 = vmul.f32 %v192, %v202
    %v204 = vmul.f32 %v191, %v202
    %v205 = vmul.f32 %v190, %v202
    %v206 = vadd.f32 %v173, %v203
    %v207 = vadd.f32 %v174, %v204
    %v208 = vadd.f32 %v175, %v205
    %s209 = sld [smem:[#allocation3 + $0x280]]
    %v210 = vstv %s209
    %v211 = vmul.f32 %v192, %v210
    %v212 = vmul.f32 %v191, %v210
    %v213 = vmul.f32 %v190, %v210
    %v214 = vadd.f32 %v181, %v211
    %v215 = vadd.f32 %v182, %v212
    %v216 = vadd.f32 %v183, %v213
    %217 = vrot.lane.b32.xlu0 %v192, 1
    %v218 = vpop.permute.xlu0 %217
    %219 = vrot.lane.b32.xlu0 %v191, 1
    %v220 = vpop.permute.xlu0 %219
    %221 = vrot.lane.b32.xlu0 %v190, 1
    %v222 = vpop.permute.xlu0 %221
    %s223 = sld [smem:[#allocation3 + $0x81]]
    %v224 = vstv %s223
    %v225 = vmul.f32 %v218, %v224
    %v226 = vmul.f32 %v220, %v224
    %v227 = vmul.f32 %v222, %v224
    %v228 = vadd.f32 %v198, %v225
    %v229 = vadd.f32 %v199, %v226
    %v230 = vadd.f32 %v200, %v227
    %s231 = sld [smem:[#allocation3 + $0x181]]
    %v232 = vstv %s231
    %v233 = vmul.f32 %v218, %v232
    %v234 = vmul.f32 %v220, %v232
    %v235 = vmul.f32 %v222, %v232
    %v236 = vadd.f32 %v206, %v233
    %v237 = vadd.f32 %v207, %v234
    %v238 = vadd.f32 %v208, %v235
    %s239 = sld [smem:[#allocation3 + $0x281]]
    %v240 = vstv %s239
    %v241 = vmul.f32 %v218, %v240
    %v242 = vmul.f32 %v220, %v240
    %v243 = vmul.f32 %v222, %v240
    %v244 = vadd.f32 %v214, %v241
    %v245 = vadd.f32 %v215, %v242
    %v246 = vadd.f32 %v216, %v243
    %247 = vrot.lane.b32.xlu0 %v192, 2
    %v248 = vpop.permute.xlu0 %247
    %249 = vrot.lane.b32.xlu0 %v191, 2
    %v250 = vpop.permute.xlu0 %249
    %251 = vrot.lane.b32.xlu0 %v190, 2
    %v252 = vpop.permute.xlu0 %251
    %s253 = sld [smem:[#allocation3 + $0x82]]
    %v254 = vstv %s253
    %v255 = vmul.f32 %v248, %v254
    %v256 = vmul.f32 %v250, %v254
    %v257 = vmul.f32 %v252, %v254
    %v258 = vadd.f32 %v228, %v255
    %v259 = vadd.f32 %v229, %v256
    %v260 = vadd.f32 %v230, %v257
    %s261 = sld [smem:[#allocation3 + $0x182]]
    %v262 = vstv %s261
    %v263 = vmul.f32 %v248, %v262
    %v264 = vmul.f32 %v250, %v262
    %v265 = vmul.f32 %v252, %v262
    %v266 = vadd.f32 %v236, %v263
    %v267 = vadd.f32 %v237, %v264
    %v268 = vadd.f32 %v238, %v265
    %s269 = sld [smem:[#allocation3 + $0x282]]
    %v270 = vstv %s269
    %v271 = vmul.f32 %v248, %v270
    %v272 = vmul.f32 %v250, %v270
    %v273 = vmul.f32 %v252, %v270
    %v274 = vadd.f32 %v244, %v271
    %v275 = vadd.f32 %v245, %v272
    %v276 = vadd.f32 %v246, %v273
    %277 = vrot.lane.b32.xlu0 %v192, 3
    %v278 = vpop.permute.xlu0 %277
    %279 = vrot.lane.b32.xlu0 %v191, 3
    %v280 = vpop.permute.xlu0 %279
    %281 = vrot.lane.b32.xlu0 %v190, 3
    %v282 = vpop.permute.xlu0 %281
    %s283 = sld [smem:[#allocation3 + $0x83]]
    %v284 = vstv %s283
    %v285 = vmul.f32 %v278, %v284
    %v286 = vmul.f32 %v280, %v284
    %v287 = vmul.f32 %v282, %v284
    %v288 = vadd.f32 %v258, %v285
    %v289 = vadd.f32 %v259, %v286
    %v290 = vadd.f32 %v260, %v287
    %s291 = sld [smem:[#allocation3 + $0x183]]
    %v292 = vstv %s291
    %v293 = vmul.f32 %v278, %v292
    %v294 = vmul.f32 %v280, %v292
    %v295 = vmul.f32 %v282, %v292
    %v296 = vadd.f32 %v266, %v293
    %v297 = vadd.f32 %v267, %v294
    %v298 = vadd.f32 %v268, %v295
    %s299 = sld [smem:[#allocation3 + $0x283]]
    %v300 = vstv %s299
    %v301 = vmul.f32 %v278, %v300
    %v302 = vmul.f32 %v280, %v300
    %v303 = vmul.f32 %v282, %v300
    %v304 = vadd.f32 %v274, %v301
    %v305 = vadd.f32 %v275, %v302
    %v306 = vadd.f32 %v276, %v303
    %vm307 = vcmp.gt.f32.partialorder %v288, 1.0
    %vm308 = vcmp.gt.f32.partialorder %v289, 1.0
    %vm309 = vcmp.gt.f32.partialorder %v290, 1.0
    %v310 = vmul.f32 %v288, 6.732
    %v311 = vmul.f32 %v289, 6.732
    %v312 = vmul.f32 %v290, 6.732
    %v313 = vsel %vm307, %v288, %v310
    %v314 = vsel %vm308, %v289, %v311
    %v315 = vsel %vm309, %v290, %v312
    %vm316 = vcmask 228352
    %317 = vst.msk [vmem:[%s3] sm:$0xff] %vm316, %v313
    %318 = vst.msk [vmem:[%s3 + $0x8] sm:$0xff] %vm316, %v314
    %vm319 = vcmask 221184
    %320 = vst.msk [vmem:[%s3 + $0x10] sm:$0x1] %vm319, %v315
    %vm321 = vcmp.gt.f32.partialorder %v296, 1.0
    %vm322 = vcmp.gt.f32.partialorder %v297, 1.0
    %vm323 = vcmp.gt.f32.partialorder %v298, 1.0
    %v324 = vmul.f32 %v296, 6.732
    %v325 = vmul.f32 %v297, 6.732
    %v326 = vmul.f32 %v298, 6.732
    %v327 = vsel %vm321, %v296, %v324
    %v328 = vsel %vm322, %v297, %v325
    %v329 = vsel %vm323, %v298, %v326
    %s330 = scalar_lea.vmem %s3, 24
    %331 = vst.msk [vmem:[%s330] sm:$0xff] %vm316, %v327
    %332 = vst.msk [vmem:[%s330 + $0x8] sm:$0xff] %vm316, %v328
    %333 = vst.msk [vmem:[%s330 + $0x10] sm:$0x1] %vm319, %v329
    %vm334 = vcmp.gt.f32.partialorder %v304, 1.0
    %vm335 = vcmp.gt.f32.partialorder %v305, 1.0
    %vm336 = vcmp.gt.f32.partialorder %v306, 1.0
    %v337 = vmul.f32 %v304, 6.732
    %v338 = vmul.f32 %v305, 6.732
    %v339 = vmul.f32 %v306, 6.732
    %v340 = vsel %vm334, %v304, %v337
    %v341 = vsel %vm335, %v305, %v338
    %v342 = vsel %vm336, %v306, %v339
    %s343 = scalar_lea.vmem %s3, 48
    %344 = vst.msk [vmem:[%s343] sm:$0xff] %vm316, %v340
    %345 = vst.msk [vmem:[%s343 + $0x8] sm:$0xff] %vm316, %v341
    %346 = vst.msk [vmem:[%s343 + $0x10] sm:$0x1] %vm319, %v342
    // Predicated region
    $region26: #{conv_transpose_where.1} parent=1 // pred_check
      _
    $region27: #{conv_transpose_where.1} parent=1 // pred_check_branch
      %348 = sbr.rel (0) target = $region29
    $region28: #{conv_transpose_where.1} parent=1 // pred_region
      _
    $region29: #{conv_transpose_where.1} parent=1 // pred_fallthru
      _
    // Predicated region
    $region30: #{conv_transpose_where.1} parent=1 // pred_check
      _
    $region31: #{conv_transpose_where.1} parent=1 // pred_check_branch
      %350 = sbr.rel (0) target = $region33
    $region32: #{conv_transpose_where.1} parent=1 // pred_region
      _
    $region33: #{conv_transpose_where.1} parent=1 // pred_fallthru
      _
    %351 = vsyncpa [#allocation4], 1
    %352 = vsyncpa [#allocation5], 1
    %353 = vsyncpa [#allocation6], 1

</llo_original>
